<compile_context>
chip_gen: v5e
topology: v5e:2x2
jax: 0.10.0
libtpu: 0.0.40
codegen_flags: <defaults>
</compile_context>

<pallas_src>
import jax
import jax.numpy as jnp
from jax.experimental import pallas as pl
from jax.experimental.pallas import tpu as pltpu

EPSILON = 1e-3        # matches the PyTorch module's EPSILON
TINY_NUMBER = 1e-6    # matches ibrnet's TINY_NUMBER used in img2charbonier

_LANES = 128          # lane width: last dim of every block
_ACC_ROWS = 8         # one vreg of sublanes per partial-sum slab
_DEF_MAX_TILE_ROWS = 2048   # 2048*128*4B = 1 MiB per f32 input tile
_MIN_ROWS_PER_CORE = 512    # v7x dual-TC gate: 2 cores from >= 1024 rows


def _round_up(x, m):
    return (x + m - 1) // m * m


def _make_kernel(m_elems, tile_rows, steps):
    """Kernel closure; m_elems/tile_rows/steps are compile-time constants."""
    tile_elems = tile_rows * _LANES

    def kernel(pred_ref, gt_ref, mask_ref, err_out, msk_out):
        core = pl.program_id(0)
        step = pl.program_id(1)

        @pl.when(step == 0)
        def _init():
            err_out[...] = jnp.zeros_like(err_out)
            msk_out[...] = jnp.zeros_like(msk_out)

        # Native-dtype loads, cast to f32 on the VPU right after load.
        p = pred_ref[...].astype(jnp.float32)
        g = gt_ref[...].astype(jnp.float32)
        m = mask_ref[...].astype(jnp.float32)
        d = p - g
        err = jnp.sqrt(d * d + EPSILON * EPSILON)   # Charbonnier per element
        wm = err * m

        # Logical (un-clamped) block id -> first flat element of this block.
        # NOTE: assumes N*C < 2^31 (int32 element indices).
        blk = core * steps + step
        start = blk * tile_elems
        ragged = start + tile_elems > m_elems       # block touches / passes the tail

        def accumulate(wm_v, m_v):
            # Pure VALU slab accumulate into the resident (8,128) partials:
            # no cross-sublane XLU reduce, no masked (1,128) store.
            err_out[...] += jnp.sum(wm_v.reshape(-1, _ACC_ROWS, _LANES), axis=0)
            msk_out[...] += jnp.sum(m_v.reshape(-1, _ACC_ROWS, _LANES), axis=0)

        @pl.when(jnp.logical_not(ragged))
        def _bulk():                                 # hot path: no index math
            accumulate(wm, m)

        @pl.when(ragged)
        def _tail():                                 # only on the boundary tile(s)
            row = jax.lax.broadcasted_iota(jnp.int32, (tile_rows, _LANES), 0)
            lane = jax.lax.broadcasted_iota(jnp.int32, (tile_rows, _LANES), 1)
            valid = start + row * _LANES + lane < m_elems
            accumulate(jnp.where(valid, wm, 0.0), jnp.where(valid, m, 0.0))

    return kernel


def criterion(outputs, ray_batch, motion_mask=None, *,
              max_tile_rows=_DEF_MAX_TILE_ROWS,
              min_rows_per_core=_MIN_ROWS_PER_CORE):
    """Pallas equivalent of Criterion.forward."""
    pred_rgb = outputs['rgb']                        # (N, C), native dtype
    gt_rgb = ray_batch['rgb']                        # (N, C), native dtype
    n, c = pred_rgb.shape
    m_elems = n * c

    # Combined per-ray mask; fuses into the bf16 per-element expansion below
    # (no standalone f32 temp is materialized).
    mask_f = outputs['mask'].astype(jnp.float32)     # (N,) -> .float()
    if motion_mask is not None:
        mask_f = mask_f * motion_mask.astype(jnp.float32)

    # ---- lane-dense (rows, 128) element-stream layout -----------------------
    # Only aligned to the 128-lane boundary (floor of 8 sublanes for tiny N).
    # If N*C % 128 == 0 the pred/gt reshape is a bitcast: zero extra copies.
    # All tile/grid-level raggedness is handled in-kernel (clamp + iota gate).
    padded_rows = max(pl.cdiv(m_elems, _LANES), _ACC_ROWS)
    pad_elems = padded_rows * _LANES - m_elems

    def _stream2d(flat):
        if pad_elems:
            flat = jnp.pad(flat, (0, pad_elems))     # <128-elem tail alignment only
        return flat.reshape(padded_rows, _LANES)

    pred2d = _stream2d(pred_rgb.reshape(-1))
    gt2d = _stream2d(gt_rgb.reshape(-1))
    # Narrow (bf16) per-element mask — exact for 0/1 masks; broadcast + pad +
    # reshape fuse into one small XLA write (no N*C float32 stream).
    mask2d = _stream2d(
        jnp.broadcast_to(mask_f.astype(jnp.bfloat16)[:, None], (n, c)).reshape(-1))

    # ---- grid / tile selection ----------------------------------------------
    if pred_rgb.dtype.itemsize < 4:                  # bf16/f16: keep ~1 MiB DMAs
        max_tile_rows *= 2
    n_cores = 2 if padded_rows >= 2 * min_rows_per_core else 1
    rows_per_core = pl.cdiv(padded_rows, n_cores)
    tile_rows = min(_round_up(rows_per_core, 32),          # 32: covers bf16/u8 packing
                    _round_up(max_tile_rows, 32),
                    (padded_rows // _ACC_ROWS) * _ACC_ROWS)  # never exceed the array
    steps = pl.cdiv(rows_per_core, tile_rows)
    last_blk = pl.cdiv(padded_rows, tile_rows) - 1   # last block holding real rows

    def in_map(core, step):
        # Grid cells past the data are redirected to the last real block; their
        # contribution is zeroed by the in-kernel tail gate (no OOB blocks).
        return (jnp.minimum(core * steps + step, last_blk), 0)

    def out_map(core, step):
        return (core, 0)                             # per-core resident accumulators

    kernel = _make_kernel(m_elems, tile_rows, steps)

    err_part, msk_part = pl.pallas_call(
        kernel,
        out_shape=(
            jax.ShapeDtypeStruct((n_cores * _ACC_ROWS, _LANES), jnp.float32),
            jax.ShapeDtypeStruct((n_cores * _ACC_ROWS, _LANES), jnp.float32),
        ),
        grid_spec=pltpu.PrefetchScalarGridSpec(
            num_scalar_prefetch=0,
            grid=(n_cores, steps),
            in_specs=[
                pl.BlockSpec((tile_rows, _LANES), in_map),
                pl.BlockSpec((tile_rows, _LANES), in_map),
                pl.BlockSpec((tile_rows, _LANES), in_map),
            ],
            out_specs=[
                pl.BlockSpec((_ACC_ROWS, _LANES), out_map),
                pl.BlockSpec((_ACC_ROWS, _LANES), out_map),
            ],
        ),
        compiler_params=pltpu.CompilerParams(
            dimension_semantics=("parallel", "arbitrary"),
            vmem_limit_bytes=32 * 1024 * 1024,
        ),
    )(pred2d, gt2d, mask2d)

    err_sum = jnp.sum(err_part)                      # tiny (n_cores*8*128,) reduces
    mask_sum = jnp.sum(msk_part) / c                 # each ray counted C times
    return err_sum / (mask_sum + TINY_NUMBER) / c


def _reference(outputs, ray_batch, motion_mask=None):
    pred_rgb = outputs['rgb'].astype(jnp.float32)
    gt_rgb = ray_batch['rgb'].astype(jnp.float32)
    mask = outputs['mask'].astype(jnp.float32)
    if motion_mask is not None:
        mask = mask * motion_mask.astype(jnp.float32)
    err = jnp.sqrt((pred_rgb - gt_rgb) ** 2 + EPSILON ** 2)
    return jnp.sum(err * mask[:, None]) / (jnp.sum(mask) + TINY_NUMBER) / pred_rgb.shape[-1]


if __name__ == "__main__":
    key = jax.random.PRNGKey(0)
    k1, k2, k3, k4 = jax.random.split(key, 4)

    n_rays, n_ch = 256, 3
    pred_rgb = jax.random.uniform(k1, (n_rays, n_ch), dtype=jnp.float32)
    gt_rgb = jax.random.uniform(k2, (n_rays, n_ch), dtype=jnp.float32)
    pred_mask = (jax.random.uniform(k3, (n_rays,)) > 0.2).astype(jnp.float32)
    motion_mask = (jax.random.uniform(k4, (n_rays,)) > 0.3).astype(jnp.float32)

    outputs = {'rgb': pred_rgb, 'mask': pred_mask}
    ray_batch = {'rgb': gt_rgb}

    # 1) small ragged case (rows < 8 -> floor pad), with motion mask
    loss = jax.block_until_ready(criterion(outputs, ray_batch, motion_mask))
    ref = _reference(outputs, ray_batch, motion_mask)
    assert jnp.allclose(loss, ref, rtol=1e-5, atol=1e-6), (loss, ref)

    # 2) motion_mask=None path
    loss2 = jax.block_until_ready(criterion(outputs, ray_batch, None))
    ref2 = _reference(outputs, ray_batch, None)
    assert jnp.allclose(loss2, ref2, rtol=1e-5, atol=1e-6), (loss2, ref2)

    # 3) lane-aligned case (N*C % 128 == 0 -> zero-copy reshape), single core,
    #    multi-step accumulation (small tile to force several grid steps).
    k5, k6, k7 = jax.random.split(jax.random.PRNGKey(1), 3)
    n_al = 4096                                   # 4096*3 = 12288 elems = 96 rows
    pred_a = jax.random.uniform(k5, (n_al, n_ch), dtype=jnp.float32)
    gt_a = jax.random.uniform(k6, (n_al, n_ch), dtype=jnp.float32)
    mask_a = (jax.random.uniform(k7, (n_al,)) > 0.2).astype(jnp.float32)
    out_a = {'rgb': pred_a, 'mask': mask_a}
    rb_a = {'rgb': gt_a}
    loss3 = jax.block_until_ready(criterion(out_a, rb_a, None, max_tile_rows=32))
    ref3 = _reference(out_a, rb_a, None)
    assert jnp.allclose(loss3, ref3, rtol=1e-5, atol=1e-6), (loss3, ref3)

    # 4) large ragged bf16 case: dual-core "parallel" axis, multi-step,
    #    in-kernel tail gate and index-clamp path all exercised.
    k8, k9, k10, k11 = jax.random.split(jax.random.PRNGKey(2), 4)
    n_big = 45003                                 # 135009 elems -> 1055 rows (ragged)
    pred_b = jax.random.uniform(k8, (n_big, n_ch), dtype=jnp.float32).astype(jnp.bfloat16)
    gt_b = jax.random.uniform(k9, (n_big, n_ch), dtype=jnp.float32).astype(jnp.bfloat16)
    mask_b = (jax.random.uniform(k10, (n_big,)) > 0.2).astype(jnp.float32)
    motion_b = (jax.random.uniform(k11, (n_big,)) > 0.3).astype(jnp.float32)
    out_b = {'rgb': pred_b, 'mask': mask_b}
    rb_b = {'rgb': gt_b}
    loss4 = jax.block_until_ready(criterion(out_b, rb_b, motion_b, max_tile_rows=128))
    ref4 = _reference(out_b, rb_b, motion_b)
    assert jnp.allclose(loss4, ref4, rtol=1e-4, atol=1e-6), (loss4, ref4)

    print("KERNEL_OK")
</pallas_src>

<mosaic_0001>
module attributes {stable_mosaic.version = 11 : i64} {
  func.func @kernel(%arg0: i32, %arg1: i32, %arg2: memref<8x128xf32, #tpu.memory_space<vmem>>, %arg3: memref<8x128xf32, #tpu.memory_space<vmem>>, %arg4: memref<8x128xbf16, #tpu.memory_space<vmem>>, %arg5: memref<8x128xf32, #tpu.memory_space<vmem>>, %arg6: memref<8x128xf32, #tpu.memory_space<vmem>>) attributes {dimension_semantics = [#tpu.dimension_semantics<parallel>, #tpu.dimension_semantics<arbitrary>], iteration_bounds = array<i64: 1, 1>, scalar_prefetch = 0 : i64, scratch_operands = 0 : i64, tpu.core_type = #tpu.core_type<tc>, window_params = [{transform_indices = @transform_0, window_bounds = array<i64: 8, 128>}, {transform_indices = @transform_1, window_bounds = array<i64: 8, 128>}, {transform_indices = @transform_2, window_bounds = array<i64: 8, 128>}, {transform_indices = @transform_3, window_bounds = array<i64: 8, 128>}, {transform_indices = @transform_4, window_bounds = array<i64: 8, 128>}]} {
    %c0_i32 = arith.constant 0 : i32
    %0 = arith.cmpi eq, %arg1, %c0_i32 : i32
    %1 = arith.extui %0 : i1 to i32
    %c0_i32_0 = arith.constant 0 : i32
    %2 = arith.cmpi ne, %1, %c0_i32_0 : i32
    scf.if %2 {
      %cst_9 = arith.constant 0.000000e+00 : f32
      %23 = vector.broadcast %cst_9 : f32 to vector<8x128xf32>
      %c0_10 = arith.constant 0 : index
      %c0_11 = arith.constant 0 : index
      %24 = vector.load %arg5[%c0_10, %c0_11] : memref<8x128xf32, #tpu.memory_space<vmem>>, vector<8x128xf32>
      tpu.vector_store %arg5[%c0_10, %c0_11], %23 {strides = array<i32>} : memref<8x128xf32, #tpu.memory_space<vmem>>, vector<8x128xf32>,
      %cst_12 = arith.constant 0.000000e+00 : f32
      %25 = vector.broadcast %cst_12 : f32 to vector<8x128xf32>
      %c0_13 = arith.constant 0 : index
      %c0_14 = arith.constant 0 : index
      %26 = vector.load %arg6[%c0_13, %c0_14] : memref<8x128xf32, #tpu.memory_space<vmem>>, vector<8x128xf32>
      tpu.vector_store %arg6[%c0_13, %c0_14], %25 {strides = array<i32>} : memref<8x128xf32, #tpu.memory_space<vmem>>, vector<8x128xf32>,
    } else {
    }
    %c0 = arith.constant 0 : index
    %c0_1 = arith.constant 0 : index
    %3 = vector.load %arg2[%c0, %c0_1] : memref<8x128xf32, #tpu.memory_space<vmem>>, vector<8x128xf32>
    %c0_2 = arith.constant 0 : index
    %c0_3 = arith.constant 0 : index
    %4 = vector.load %arg3[%c0_2, %c0_3] : memref<8x128xf32, #tpu.memory_space<vmem>>, vector<8x128xf32>
    %c0_4 = arith.constant 0 : index
    %c0_5 = arith.constant 0 : index
    %5 = vector.load %arg4[%c0_4, %c0_5] : memref<8x128xbf16, #tpu.memory_space<vmem>>, vector<8x128xbf16>
    %6 = arith.extf %5 : vector<8x128xbf16> to vector<8x128xf32>
    %7 = arith.subf %3, %4 : vector<8x128xf32>
    %8 = arith.mulf %7, %7 : vector<8x128xf32>
    %cst = arith.constant 9.99999997E-7 : f32
    %9 = vector.broadcast %cst : f32 to vector<8x128xf32>
    %10 = arith.addf %8, %9 : vector<8x128xf32>
    %11 = math.sqrt %10 : vector<8x128xf32>
    %12 = arith.mulf %11, %6 : vector<8x128xf32>
    %c1_i32 = arith.constant 1 : i32
    %13 = arith.muli %arg0, %c1_i32 : i32
    %14 = arith.addi %13, %arg1 : i32
    %c1024_i32 = arith.constant 1024 : i32
    %15 = arith.muli %14, %c1024_i32 : i32
    %c1024_i32_6 = arith.constant 1024 : i32
    %16 = arith.addi %15, %c1024_i32_6 : i32
    %c768_i32 = arith.constant 768 : i32
    %17 = arith.cmpi sgt, %16, %c768_i32 : i32
    %true = arith.constant true
    %18 = arith.xori %17, %true : i1
    %19 = arith.extui %18 : i1 to i32
    %c0_i32_7 = arith.constant 0 : i32
    %20 = arith.cmpi ne, %19, %c0_i32_7 : i32
    scf.if %20 {
      %c0_9 = arith.constant 0 : index
      %c0_10 = arith.constant 0 : index
      %23 = vector.load %arg5[%c0_9, %c0_10] : memref<8x128xf32, #tpu.memory_space<vmem>>, vector<8x128xf32>
      %24 = vector.shape_cast %12 : vector<8x128xf32> to vector<1x8x128xf32>
      %cst_11 = arith.constant dense<0.000000e+00> : vector<8x128xf32>
      %25 = vector.multi_reduction <add>, %24, %cst_11 [0] : vector<1x8x128xf32> to vector<8x128xf32>
      %26 = arith.addf %23, %25 : vector<8x128xf32>
      %c0_12 = arith.constant 0 : index
      %c0_13 = arith.constant 0 : index
      %27 = vector.load %arg5[%c0_12, %c0_13] : memref<8x128xf32, #tpu.memory_space<vmem>>, vector<8x128xf32>
      tpu.vector_store %arg5[%c0_12, %c0_13], %26 {strides = array<i32>} : memref<8x128xf32, #tpu.memory_space<vmem>>, vector<8x128xf32>,
      %c0_14 = arith.constant 0 : index
      %c0_15 = arith.constant 0 : index
      %28 = vector.load %arg6[%c0_14, %c0_15] : memref<8x128xf32, #tpu.memory_space<vmem>>, vector<8x128xf32>
      %29 = vector.shape_cast %6 : vector<8x128xf32> to vector<1x8x128xf32>
      %cst_16 = arith.constant dense<0.000000e+00> : vector<8x128xf32>
      %30 = vector.multi_reduction <add>, %29, %cst_16 [0] : vector<1x8x128xf32> to vector<8x128xf32>
      %31 = arith.addf %28, %30 : vector<8x128xf32>
      %c0_17 = arith.constant 0 : index
      %c0_18 = arith.constant 0 : index
      %32 = vector.load %arg6[%c0_17, %c0_18] : memref<8x128xf32, #tpu.memory_space<vmem>>, vector<8x128xf32>
      tpu.vector_store %arg6[%c0_17, %c0_18], %31 {strides = array<i32>} : memref<8x128xf32, #tpu.memory_space<vmem>>, vector<8x128xf32>,
    } else {
    }
    %21 = arith.extui %17 : i1 to i32
    %c0_i32_8 = arith.constant 0 : i32
    %22 = arith.cmpi ne, %21, %c0_i32_8 : i32
    scf.if %22 {
      %23 = tpu.iota {dimensions = array<i32: 0>} : vector<8x128xi32>
      %24 = tpu.iota {dimensions = array<i32: 1>} : vector<8x128xi32>
      %c128_i32 = arith.constant 128 : i32
      %25 = vector.broadcast %c128_i32 : i32 to vector<8x128xi32>
      %26 = arith.muli %23, %25 : vector<8x128xi32>
      %27 = vector.broadcast %15 : i32 to vector<8x128xi32>
      %28 = arith.addi %27, %26 : vector<8x128xi32>
      %29 = arith.addi %28, %24 : vector<8x128xi32>
      %c768_i32_9 = arith.constant 768 : i32
      %30 = vector.broadcast %c768_i32_9 : i32 to vector<8x128xi32>
      %31 = arith.cmpi slt, %29, %30 : vector<8x128xi32>
      %cst_10 = arith.constant 0.000000e+00 : f32
      %32 = vector.broadcast %cst_10 : f32 to vector<8x128xf32>
      %33 = arith.select %31, %12, %32 : vector<8x128xi1>, vector<8x128xf32>
      %cst_11 = arith.constant 0.000000e+00 : f32
      %34 = vector.broadcast %cst_11 : f32 to vector<8x128xf32>
      %35 = arith.select %31, %6, %34 : vector<8x128xi1>, vector<8x128xf32>
      %c0_12 = arith.constant 0 : index
      %c0_13 = arith.constant 0 : index
      %36 = vector.load %arg5[%c0_12, %c0_13] : memref<8x128xf32, #tpu.memory_space<vmem>>, vector<8x128xf32>
      %37 = vector.shape_cast %33 : vector<8x128xf32> to vector<1x8x128xf32>
      %cst_14 = arith.constant dense<0.000000e+00> : vector<8x128xf32>
      %38 = vector.multi_reduction <add>, %37, %cst_14 [0] : vector<1x8x128xf32> to vector<8x128xf32>
      %39 = arith.addf %36, %38 : vector<8x128xf32>
      %c0_15 = arith.constant 0 : index
      %c0_16 = arith.constant 0 : index
      %40 = vector.load %arg5[%c0_15, %c0_16] : memref<8x128xf32, #tpu.memory_space<vmem>>, vector<8x128xf32>
      tpu.vector_store %arg5[%c0_15, %c0_16], %39 {strides = array<i32>} : memref<8x128xf32, #tpu.memory_space<vmem>>, vector<8x128xf32>,
      %c0_17 = arith.constant 0 : index
      %c0_18 = arith.constant 0 : index
      %41 = vector.load %arg6[%c0_17, %c0_18] : memref<8x128xf32, #tpu.memory_space<vmem>>, vector<8x128xf32>
      %42 = vector.shape_cast %35 : vector<8x128xf32> to vector<1x8x128xf32>
      %cst_19 = arith.constant dense<0.000000e+00> : vector<8x128xf32>
      %43 = vector.multi_reduction <add>, %42, %cst_19 [0] : vector<1x8x128xf32> to vector<8x128xf32>
      %44 = arith.addf %41, %43 : vector<8x128xf32>
      %c0_20 = arith.constant 0 : index
      %c0_21 = arith.constant 0 : index
      %45 = vector.load %arg6[%c0_20, %c0_21] : memref<8x128xf32, #tpu.memory_space<vmem>>, vector<8x128xf32>
      tpu.vector_store %arg6[%c0_20, %c0_21], %44 {strides = array<i32>} : memref<8x128xf32, #tpu.memory_space<vmem>>, vector<8x128xf32>,
    } else {
    }
    return
  }
  func.func @transform_0(%arg0: i32, %arg1: i32) -> (i32, i32) {
    %c1_i32 = arith.constant 1 : i32
    %0 = arith.muli %arg0, %c1_i32 : i32
    %1 = arith.addi %0, %arg1 : i32
    %c0_i32 = arith.constant 0 : i32
    %2 = arith.minsi %1, %c0_i32 : i32
    %c0_i32_0 = arith.constant 0 : i32
    %c0_i32_1 = arith.constant 0 : i32
    return %2, %c0_i32_0 : i32, i32
  }
  func.func @transform_1(%arg0: i32, %arg1: i32) -> (i32, i32) {
    %c1_i32 = arith.constant 1 : i32
    %0 = arith.muli %arg0, %c1_i32 : i32
    %1 = arith.addi %0, %arg1 : i32
    %c0_i32 = arith.constant 0 : i32
    %2 = arith.minsi %1, %c0_i32 : i32
    %c0_i32_0 = arith.constant 0 : i32
    %c0_i32_1 = arith.constant 0 : i32
    return %2, %c0_i32_0 : i32, i32
  }
  func.func @transform_2(%arg0: i32, %arg1: i32) -> (i32, i32) {
    %c1_i32 = arith.constant 1 : i32
    %0 = arith.muli %arg0, %c1_i32 : i32
    %1 = arith.addi %0, %arg1 : i32
    %c0_i32 = arith.constant 0 : i32
    %2 = arith.minsi %1, %c0_i32 : i32
    %c0_i32_0 = arith.constant 0 : i32
    %c0_i32_1 = arith.constant 0 : i32
    return %2, %c0_i32_0 : i32, i32
  }
  func.func @transform_3(%arg0: i32, %arg1: i32) -> (i32, i32) {
    %c0_i32 = arith.constant 0 : i32
    %c0_i32_0 = arith.constant 0 : i32
    return %arg0, %c0_i32 : i32, i32
  }
  func.func @transform_4(%arg0: i32, %arg1: i32) -> (i32, i32) {
    %c0_i32 = arith.constant 0 : i32
    %c0_i32_0 = arith.constant 0 : i32
    return %arg0, %c0_i32 : i32, i32
  }
}

</mosaic_0001>

<llo_original>
// kernel: tpu_custom_call.1
$region0: #{tpu_custom_call.1}
  #allocation0 [shape = 'u32[]', space=smem, size = 0x4, offset = 0x4, fixed_abs, tag = 'smem constant byte address 0x4 - core index']
  #allocation1 [shape = 'u32[72,128]{1,0:T(1,128)}', space=vmem, size = 0x9000, scoped, tag = 'internal scratch']
  %s0 = inlined_call_operand.hbm [shape: f32[8,128], index: 0, kind: input, shape index: {}]
  %s1 = inlined_call_operand.hbm [shape: f32[8,128], index: 1, kind: input, shape index: {}]
  %s2 = inlined_call_operand.hbm [shape: bf16[8,128], index: 2, kind: input, shape index: {}]
  %s3 = inlined_call_operand.hbm [shape: f32[8,128], index: 3, kind: output, shape index: {0}]
  %s4 = inlined_call_operand.hbm [shape: f32[8,128], index: 4, kind: output, shape index: {1}]
  %5 = xla_tuple %s3, %s4
  %s6 = sld [smem:[#allocation0]]
  $region54: #{tpu_custom_call.1} parent=0
    _
  %s8 = ssub.s32 1, %s6
  %s9 = scalar_select 0, %s8, %s6
  $region1: #{tpu_custom_call.1} parent=0
    #allocation2 [shape = 'u8[4096]{0}', space=vmem, size = 0x1000, scoped, tag = 'input window, operand 0, single buffered']
    #allocation3 [shape = 's32[1]{0}', space=sflag, size = 0x4, scoped, tag = 'scoped memory for tpu_custom_call.1']
    #allocation4 [shape = 's32[1]{0}', space=sflag, size = 0x4, scoped, tag = 'scoped memory for tpu_custom_call.1']
    #allocation5 [shape = 'u8[4096]{0}', space=vmem, size = 0x1000, scoped, tag = 'input window, operand 1, single buffered']
    #allocation6 [shape = 's32[1]{0}', space=sflag, size = 0x4, scoped, tag = 'scoped memory for tpu_custom_call.1']
    #allocation7 [shape = 'u8[2048]{0}', space=vmem, size = 0x800, scoped, tag = 'input window, operand 2, single buffered']
    #allocation8 [shape = 'u8[4096]{0}', space=vmem, size = 0x1000, scoped, tag = 'output window, operand 0, single buffered']
    #allocation9 [shape = 'u8[4096]{0}', space=vmem, size = 0x1000, scoped, tag = 'output window, operand 1, single buffered']
    #allocation10 [shape = 's32[1]{0}', space=sflag, size = 0x4, scoped, tag = 'scoped memory for tpu_custom_call.1']
    %10 = vsyncpa [#allocation3], 0
    %11 = vsyncpa [#allocation6], 0
    %12 = vsyncpa [#allocation4], 0
    %13 = vsyncpa [#allocation10], 0
    // Predicated region
    $region2: #{tpu_custom_call.1} parent=1 // pred_check
      _
    $region3: #{tpu_custom_call.1} parent=1 // pred_check_branch
      %15 = sbr.rel (0) target = $region5
    $region4: #{tpu_custom_call.1} parent=1 // pred_region
      %s16 = sadd.s32 0, 0
      %p17 = scmp.lt.s32.totalorder %s16, 0
      %s18 = scalar_select %p17, %s16, 0
      %20 = vsyncadd [#allocation3], 0
      %s21 = smul.addr %s18, 8
      %s22 = scalar_lea.hbm %s0, %s21
      %s24 = sshll.u32 %s22, 4
      %s25 = int_to_ptr.hbm [resolvable:$true] %s24
      %s26 = sshll.u32 [#allocation2], 4
      %s27 = int_to_ptr.vmem [resolvable:$true] %s26
      %29 = dma.hbm_to_vmem [thread:$0]  %s25, 128, %s27, [#allocation3]
    $region5: #{tpu_custom_call.1} parent=1 // pred_fallthru
      _
    // Predicated region
    $region6: #{tpu_custom_call.1} parent=1 // pred_check
      _
    $region7: #{tpu_custom_call.1} parent=1 // pred_check_branch
      %31 = sbr.rel (0) target = $region9
    $region8: #{tpu_custom_call.1} parent=1 // pred_region
      %s32 = sadd.s32 0, 0
      %p33 = scmp.lt.s32.totalorder %s32, 0
      %s34 = scalar_select %p33, %s32, 0
      %36 = vsyncadd [#allocation6], 0
      %s37 = smul.addr %s34, 8
      %s38 = scalar_lea.hbm %s1, %s37
      %s40 = sshll.u32 %s38, 4
      %s41 = int_to_ptr.hbm [resolvable:$true] %s40
      %s42 = sshll.u32 [#allocation5], 4
      %s43 = int_to_ptr.vmem [resolvable:$true] %s42
      %45 = dma.hbm_to_vmem [thread:$0]  %s41, 128, %s43, [#allocation6]
    $region9: #{tpu_custom_call.1} parent=1 // pred_fallthru
      _
    // Predicated region
    $region10: #{tpu_custom_call.1} parent=1 // pred_check
      _
    $region11: #{tpu_custom_call.1} parent=1 // pred_check_branch
      %47 = sbr.rel (0) target = $region13
    $region12: #{tpu_custom_call.1} parent=1 // pred_region
      %s48 = sadd.s32 0, 0
      %p49 = scmp.lt.s32.totalorder %s48, 0
      %s50 = scalar_select %p49, %s48, 0
      %52 = vsyncadd [#allocation6], 0
      %s53 = smul.addr %s50, 4
      %s54 = scalar_lea.hbm %s2, %s53
      %s56 = sshll.u32 %s54, 4
      %s57 = int_to_ptr.hbm [resolvable:$true] %s56
      %s58 = sshll.u32 [#allocation7], 4
      %s59 = int_to_ptr.vmem [resolvable:$true] %s58
      %61 = dma.hbm_to_vmem [thread:$0]  %s57, 64, %s59, [#allocation6]
    $region13: #{tpu_custom_call.1} parent=1 // pred_fallthru
      _
    // Predicated region
    $region14: #{tpu_custom_call.1} parent=1 // pred_check
      _
    $region15: #{tpu_custom_call.1} parent=1 // pred_check_branch
      %63 = sbr.rel (0) target = $region17
    $region16: #{tpu_custom_call.1} parent=1 // pred_region
      %65 = dma.done [#allocation3], 128
    $region17: #{tpu_custom_call.1} parent=1 // pred_fallthru
      _
    // Predicated region
    $region18: #{tpu_custom_call.1} parent=1 // pred_check
      _
    $region19: #{tpu_custom_call.1} parent=1 // pred_check_branch
      %67 = sbr.rel (0) target = $region21
    $region20: #{tpu_custom_call.1} parent=1 // pred_region
      %69 = dma.done [#allocation6], 128
    $region21: #{tpu_custom_call.1} parent=1 // pred_fallthru
      _
    // Predicated region
    $region22: #{tpu_custom_call.1} parent=1 // pred_check
      _
    $region23: #{tpu_custom_call.1} parent=1 // pred_check_branch
      %71 = sbr.rel (0) target = $region25
    $region24: #{tpu_custom_call.1} parent=1 // pred_region
      %73 = dma.done [#allocation6], 64
    $region25: #{tpu_custom_call.1} parent=1 // pred_fallthru
      _
    %s74 = sadd.s32 0, 0
    %p75 = scmp.lt.s32.totalorder %s74, 0
    %s76 = scalar_select %p75, %s74, 0
    %s77 = sadd.s32 0, 0
    %p78 = scmp.lt.s32.totalorder %s77, 0
    %s79 = scalar_select %p78, %s77, 0
    %s80 = sadd.s32 0, 0
    %p81 = scmp.lt.s32.totalorder %s80, 0
    %s82 = scalar_select %p81, %s80, 0
    %p83 = scmp.eq.s32.totalorder 0, 0
    // Predicated region
    $region26: #{tpu_custom_call.1} parent=1 // pred_check
      %p84 = pneg %p83
    $region27: #{tpu_custom_call.1} parent=1 // pred_check_branch
      %86 = sbr.rel (%p84) target = $region29
    $region28: #{tpu_custom_call.1} parent=1 // pred_region
      %87 = vst [vmem:[#allocation8] sm:$0xff] 0.0
      %88 = vst [vmem:[#allocation9] sm:$0xff] 0.0
    $region29: #{tpu_custom_call.1} parent=1 // pred_fallthru
      _
    %v89 = vld [vmem:[#allocation2] sm:$0xff]
    %v90 = vld [vmem:[#allocation5] sm:$0xff]
    %v91 = vld [vmem:[#allocation7] sm:$0xf]
    %v92 = vunpack.c.l.bf16 %v91
    %v93 = vsub.f32 %v89, %v90
    %v94 = vmul.f32 %v93, %v93
    %v95 = vadd.f32 %v94, 1e-06
    %v96 = vrsqrt.pop %v95
    %v97 = vmul.f32 %v96, %v95
    %v98 = vmul.f32 %v97, %v96
    %v99 = vmul.f32 0.5, %v98
    %v100 = vsub.f32 1.5, %v99
    %v101 = vmul.f32 %v96, %v100
    %v102 = vmul.f32 %v95, %v101
    %vm103 = vcmp.eq.f32.partialorder %v95, inf
    %v104 = vsel %vm103, %v95, %v102
    %vm105 = vcmp.eq.f32.partialorder %v95, 0.0
    %v106 = vand.u32 %v95, 2147483648
    %v107 = vsel %vm105, %v106, %v104
    %v108 = vmul.f32 %v107, %v92
    %s109 = sadd.s32 0, 0
    %s110 = smul.u32 %s109, 1024
    %s111 = sadd.s32 %s110, 1024
    %p112 = scmp.gt.s32.totalorder %s111, 768
    %p113 = scmp.le.s32.totalorder %s111, 768
    // Predicated region
    $region30: #{tpu_custom_call.1} parent=1 // pred_check
      %p114 = pneg %p113
    $region31: #{tpu_custom_call.1} parent=1 // pred_check_branch
      %116 = sbr.rel (%p114) target = $region33
    $region32: #{tpu_custom_call.1} parent=1 // pred_region
      %v117 = vld [vmem:[#allocation8] sm:$0xff]
      %v118 = vadd.f32 %v108, 0.0
      %v119 = vadd.f32 %v117, %v118
      %120 = vst [vmem:[#allocation8] sm:$0xff] %v119
      %v121 = vld [vmem:[#allocation9] sm:$0xff]
      %v122 = vadd.f32 %v92, 0.0
      %v123 = vadd.f32 %v121, %v122
      %124 = vst [vmem:[#allocation9] sm:$0xff] %v123
    $region33: #{tpu_custom_call.1} parent=1 // pred_fallthru
      _
    // Predicated region
    $region34: #{tpu_custom_call.1} parent=1 // pred_check
      %p125 = pneg %p112
    $region35: #{tpu_custom_call.1} parent=1 // pred_check_branch
      %127 = sbr.rel (%p125) target = $region37
    $region36: #{tpu_custom_call.1} parent=1 // pred_region
      %v128 = vlaneseq
      %v129 = vshrl.u32 %v128, 7
      %v130 = vlaneseq
      %v131 = vand.u32 %v130, 127
      %v132 = vmul.u32 %v129, 128
      %v133 = vstv %s110
      %v134 = vadd.s32 %v133, %v132
      %v135 = vadd.s32 %v134, %v131
      %vm136 = vcmp.lt.s32.totalorder %v135, 768
      %v137 = vsel %vm136, %v108, 0.0
      %v138 = vsel %vm136, %v92, 0.0
      %v139 = vld [vmem:[#allocation8] sm:$0xff]
      %v140 = vadd.f32 %v137, 0.0
      %v141 = vadd.f32 %v139, %v140
      %142 = vst [vmem:[#allocation8] sm:$0xff] %v141
      %v143 = vld [vmem:[#allocation9] sm:$0xff]
      %v144 = vadd.f32 %v138, 0.0
      %v145 = vadd.f32 %v143, %v144
      %146 = vst [vmem:[#allocation9] sm:$0xff] %v145
    $region37: #{tpu_custom_call.1} parent=1 // pred_fallthru
      _
    // Predicated region
    $region38: #{tpu_custom_call.1} parent=1 // pred_check
      _
    $region39: #{tpu_custom_call.1} parent=1 // pred_check_branch
      %148 = sbr.rel (0) target = $region41
    $region40: #{tpu_custom_call.1} parent=1 // pred_region
      %150 = vsyncadd [#allocation4], 0
      %s152 = sshll.u32 [#allocation8], 4
      %s153 = int_to_ptr.vmem [resolvable:$true] %s152
      %s154 = sshll.u32 %s3, 4
      %s155 = int_to_ptr.hbm [resolvable:$true] %s154
      %157 = dma.vmem_to_hbm [thread:$0]  %s153, 128, %s155, [#allocation4]
    $region41: #{tpu_custom_call.1} parent=1 // pred_fallthru
      _
    // Predicated region
    $region42: #{tpu_custom_call.1} parent=1 // pred_check
      _
    $region43: #{tpu_custom_call.1} parent=1 // pred_check_branch
      %159 = sbr.rel (0) target = $region45
    $region44: #{tpu_custom_call.1} parent=1 // pred_region
      %161 = vsyncadd [#allocation10], 0
      %s163 = sshll.u32 [#allocation9], 4
      %s164 = int_to_ptr.vmem [resolvable:$true] %s163
      %s165 = sshll.u32 %s4, 4
      %s166 = int_to_ptr.hbm [resolvable:$true] %s165
      %168 = dma.vmem_to_hbm [thread:$0]  %s164, 128, %s166, [#allocation10]
    $region45: #{tpu_custom_call.1} parent=1 // pred_fallthru
      _
    // Predicated region
    $region46: #{tpu_custom_call.1} parent=1 // pred_check
      _
    $region47: #{tpu_custom_call.1} parent=1 // pred_check_branch
      %170 = sbr.rel (0) target = $region49
    $region48: #{tpu_custom_call.1} parent=1 // pred_region
      %172 = dma.done [#allocation4], 128
    $region49: #{tpu_custom_call.1} parent=1 // pred_fallthru
      _
    // Predicated region
    $region50: #{tpu_custom_call.1} parent=1 // pred_check
      _
    $region51: #{tpu_custom_call.1} parent=1 // pred_check_branch
      %174 = sbr.rel (0) target = $region53
    $region52: #{tpu_custom_call.1} parent=1 // pred_region
      %176 = dma.done [#allocation10], 128
    $region53: #{tpu_custom_call.1} parent=1 // pred_fallthru
      _
    %177 = vsyncpa [#allocation3], 1
    %178 = vsyncpa [#allocation6], 1
    %179 = vsyncpa [#allocation4], 1
    %180 = vsyncpa [#allocation10], 1

</llo_original>
